<compile_context>
chip_gen: v6e
topology: v6e:2x2x1
jax: 0.10.0
libtpu: 0.0.40
codegen_flags: <defaults>
</compile_context>

<pallas_src>
import functools

import jax
import jax.numpy as jnp
from jax.experimental import pallas as pl
from jax.experimental.pallas import tpu as pltpu

_NEG_BIG = -1e30  # padded-logit bias: finite, exp(_NEG_BIG - max) == 0 in f32


def _round_up(x, m):
    return ((x + m - 1) // m) * m


def _twolayer_kernel(x_ref, w1_ref, b1_ref, w2_ref, b2_ref, o_ref):
    # x_ref : (TILE_B, D_in)      f32  (cast to bf16 in-kernel: free VPU filler)
    # w1_ref: (D_in, H)           bf16 (VMEM-resident)
    # b1_ref: (1, H)              f32
    # w2_ref: (H, D_out_pad)      bf16 (padded columns are zero)
    # b2_ref: (1, D_out_pad)      f32  (padded entries are -1e30)
    # o_ref : (TILE_B, D_out)     f32  (un-padded: only real logits stored)
    x = x_ref[...].astype(jnp.bfloat16)

    # fc1 + ReLU: bf16 operands, f32 MXU accumulate, f32 bias/activation.
    h = jnp.dot(x, w1_ref[...], preferred_element_type=jnp.float32) + b1_ref[...]
    h = jnp.maximum(h, 0.0)

    # fc2: re-quantize activations to bf16 for the MXU, accumulate in f32.
    y = jnp.dot(h.astype(jnp.bfloat16), w2_ref[...],
                preferred_element_type=jnp.float32) + b2_ref[...]

    # log_softmax over the lane-padded logits.  Padded columns carry a finite
    # -1e30 bias: they never win the max and exp(pad - max) underflows to
    # exactly 0, so they contribute nothing to the log-sum-exp (keep f32!).
    m = jnp.max(y, axis=1, keepdims=True)
    s = y - m
    lse = jnp.log(jnp.sum(jnp.exp(s), axis=1, keepdims=True))

    # Store only the real D_out columns; the lane padding never leaves VMEM.
    d_out = o_ref.shape[1]
    o_ref[...] = (s - lse)[:, :d_out].astype(o_ref.dtype)


def prepare_params(w1, b1, w2, b2):
    """One-time preprocessing of PyTorch-layout Linear params.

    w1: (H, D_in), b1: (H,), w2: (D_out, H), b2: (D_out,)
    Returns ((w1_t, b1_2d, w2_tp, b2_p), D_out): weights transposed to
    (in, out) and cast to bf16; fc2 output dim padded to a multiple of 128
    with zero weight columns and -1e30 bias entries.  D_out is a Python int.
    """
    H, D_in = w1.shape
    D_out = w2.shape[0]
    D_out_pad = _round_up(D_out, 128)

    w1_t = jnp.asarray(w1).T.astype(jnp.bfloat16)                  # (D_in, H)
    b1_2d = jnp.asarray(b1).reshape(1, H).astype(jnp.float32)      # (1, H)

    w2_t = jnp.asarray(w2).T.astype(jnp.float32)                   # (H, D_out)
    w2_tp = (jnp.zeros((H, D_out_pad), jnp.float32)
             .at[:, :D_out].set(w2_t)
             .astype(jnp.bfloat16))                                # (H, D_out_pad)

    b2_p = jnp.full((1, D_out_pad), _NEG_BIG, jnp.float32)
    b2_p = b2_p.at[:, :D_out].set(
        jnp.asarray(b2).reshape(1, D_out).astype(jnp.float32))

    return (w1_t, b1_2d, w2_tp, b2_p), D_out


@functools.partial(jax.jit, static_argnums=(2, 3))
def _two_layer_net_impl(x_nchw, params, d_out, tile_b):
    w1_t, b1_2d, w2_tp, b2_p = params
    D_in, H = w1_t.shape
    D_out_pad = w2_tp.shape[1]

    x2d = x_nchw.reshape(-1, D_in)          # == x.view(-1, D_in); stays f32
    B = x2d.shape[0]

    # Balanced batch tiles: <= tile_b rows each, multiple of 16, pad waste
    # bounded by one tile.  (On v7x with ample VMEM, tile_b=512 cuts per-step
    # pipeline overhead; on v5e keep 128-256.)
    n_tiles = pl.cdiv(B, tile_b)
    tb = _round_up(pl.cdiv(B, n_tiles), 16)
    B_pad = _round_up(B, tb)
    if B_pad != B:
        x2d = jnp.pad(x2d, ((0, B_pad - B), (0, 0)))
    grid = (B_pad // tb,)

    # Explicit scoped-VMEM budget: resident weights (double-buffered by
    # default) + double-buffered x/out tiles, with headroom.
    vmem_est = (2 * (D_in * H + H * D_out_pad) * 2        # bf16 weights
                + 2 * (H + D_out_pad) * 4                 # f32 biases
                + 2 * tb * D_in * 4                       # f32 x tiles
                + 2 * tb * d_out * 4)                     # f32 out tiles
    vmem_limit = int(min(64 * 1024 * 1024,
                         max(2 * vmem_est + (1 << 20), 4 * 1024 * 1024)))

    cost = pl.CostEstimate(
        flops=2 * B_pad * (D_in * H + H * D_out_pad),
        transcendentals=B_pad * D_out_pad,
        bytes_accessed=(B_pad * D_in * 4                  # x (f32)
                        + (D_in * H + H * D_out_pad) * 2  # bf16 weights
                        + (H + D_out_pad) * 4             # f32 biases
                        + B_pad * d_out * 4))             # f32 output

    out = pl.pallas_call(
        _twolayer_kernel,
        out_shape=jax.ShapeDtypeStruct((B_pad, d_out), jnp.float32),
        grid=grid,
        in_specs=[
            pl.BlockSpec((tb, D_in), lambda i: (i, 0)),        # x: tiled over B
            pl.BlockSpec((D_in, H), lambda i: (0, 0)),         # w1: VMEM-resident
            pl.BlockSpec((1, H), lambda i: (0, 0)),            # b1: VMEM-resident
            pl.BlockSpec((H, D_out_pad), lambda i: (0, 0)),    # w2: VMEM-resident
            pl.BlockSpec((1, D_out_pad), lambda i: (0, 0)),    # b2: VMEM-resident
        ],
        out_specs=pl.BlockSpec((tb, d_out), lambda i: (i, 0)),
        compiler_params=pltpu.CompilerParams(
            dimension_semantics=("parallel",),                 # megacore on v7x
            vmem_limit_bytes=vmem_limit),
        cost_estimate=cost,
    )(x2d, w1_t, b1_2d, w2_tp, b2_p)

    return out if B_pad == B else out[:B]


def two_layer_net(x_nchw, prepared, tile_b=256):
    """Forward pass.  x_nchw: (B, C, H, W) -> (B, D_out) log-probabilities."""
    params, d_out = prepared            # d_out is a static Python int
    return _two_layer_net_impl(x_nchw, params, d_out, tile_b)


# ---------------------------------------------------------------------------
# References for correctness checks.
# ---------------------------------------------------------------------------
def _ref_forward_f32(x_nchw, w1, b1, w2, b2):
    D_in = w1.shape[1]
    x = x_nchw.reshape(-1, D_in)
    h = jnp.maximum(x @ w1.T + b1, 0.0)
    y = h @ w2.T + b2
    return jax.nn.log_softmax(y, axis=1)


def _ref_forward_bf16(x_nchw, w1, b1, w2, b2):
    # Mirrors the kernel's precision choices (bf16 operands, f32 accumulate).
    D_in = w1.shape[1]
    x = x_nchw.reshape(-1, D_in).astype(jnp.bfloat16)
    h = jnp.dot(x, w1.T.astype(jnp.bfloat16),
                preferred_element_type=jnp.float32) + b1
    h = jnp.maximum(h, 0.0)
    y = jnp.dot(h.astype(jnp.bfloat16), w2.T.astype(jnp.bfloat16),
                preferred_element_type=jnp.float32) + b2
    return jax.nn.log_softmax(y, axis=1)


if __name__ == "__main__":
    # Small MNIST-like shapes: B=8 single-channel 16x16 images -> D_in=256.
    B, C, Himg, Wimg = 8, 1, 16, 16
    D_in, H, D_out = C * Himg * Wimg, 128, 10

    key = jax.random.PRNGKey(0)
    kx, kw1, kb1, kw2, kb2 = jax.random.split(key, 5)

    x = jax.random.normal(kx, (B, C, Himg, Wimg), dtype=jnp.float32)

    # PyTorch-style init: U(-1/sqrt(fan_in), 1/sqrt(fan_in)).
    lim1 = 1.0 / (D_in ** 0.5)
    lim2 = 1.0 / (H ** 0.5)
    w1 = jax.random.uniform(kw1, (H, D_in), jnp.float32, -lim1, lim1)
    b1 = jax.random.uniform(kb1, (H,), jnp.float32, -lim1, lim1)
    w2 = jax.random.uniform(kw2, (D_out, H), jnp.float32, -lim2, lim2)
    b2 = jax.random.uniform(kb2, (D_out,), jnp.float32, -lim2, lim2)

    prepared = prepare_params(w1, b1, w2, b2)   # one-time transpose/cast/pad

    out = two_layer_net(x, prepared)
    out = jax.block_until_ready(out)
    assert out.shape == (B, D_out), out.shape

    # Primary check: matches a bf16-operand / f32-accumulate reference tightly.
    ref_bf16 = _ref_forward_bf16(x, w1, b1, w2, b2)
    assert jnp.allclose(out, ref_bf16, atol=2e-3, rtol=2e-3), (
        float(jnp.max(jnp.abs(out - ref_bf16))))

    # Sanity check: close to the full-f32 reference (bf16 quantization noise).
    ref_f32 = _ref_forward_f32(x, w1, b1, w2, b2)
    assert jnp.allclose(out, ref_f32, atol=1e-1, rtol=1e-1), (
        float(jnp.max(jnp.abs(out - ref_f32))))

    print("KERNEL_OK")
</pallas_src>

<mosaic_0001>
module attributes {stable_mosaic.version = 11 : i64} {
  func.func @_twolayer_kernel(%arg0: i32, %arg1: memref<16x256xf32, #tpu.memory_space<vmem>>, %arg2: memref<256x128xbf16, #tpu.memory_space<vmem>>, %arg3: memref<1x128xf32, #tpu.memory_space<vmem>>, %arg4: memref<128x128xbf16, #tpu.memory_space<vmem>>, %arg5: memref<1x128xf32, #tpu.memory_space<vmem>>, %arg6: memref<16x10xf32, #tpu.memory_space<vmem>>) attributes {dimension_semantics = [#tpu.dimension_semantics<parallel>], iteration_bounds = array<i64: 1>, scalar_prefetch = 0 : i64, scratch_operands = 0 : i64, tpu.core_type = #tpu.core_type<tc>, window_params = [{transform_indices = @transform_0, window_bounds = array<i64: 16, 256>}, {pipeline_mode = #tpu.pipeline_mode<synchronous>, transform_indices = @transform_1, window_bounds = array<i64: 256, 128>}, {pipeline_mode = #tpu.pipeline_mode<synchronous>, transform_indices = @transform_2, window_bounds = array<i64: 1, 128>}, {pipeline_mode = #tpu.pipeline_mode<synchronous>, transform_indices = @transform_3, window_bounds = array<i64: 128, 128>}, {pipeline_mode = #tpu.pipeline_mode<synchronous>, transform_indices = @transform_4, window_bounds = array<i64: 1, 128>}, {transform_indices = @transform_5, window_bounds = array<i64: 16, 10>}]} {
    %c0 = arith.constant 0 : index
    %c0_0 = arith.constant 0 : index
    %0 = vector.load %arg1[%c0, %c0_0] : memref<16x256xf32, #tpu.memory_space<vmem>>, vector<16x256xf32>
    %1 = arith.truncf %0 : vector<16x256xf32> to vector<16x256xbf16>
    %c0_1 = arith.constant 0 : index
    %c0_2 = arith.constant 0 : index
    %2 = vector.load %arg2[%c0_1, %c0_2] : memref<256x128xbf16, #tpu.memory_space<vmem>>, vector<256x128xbf16>
    %cst = arith.constant dense<0.000000e+00> : vector<16x128xf32>
    %3 = tpu.matmul %1, %2, %cst {dimension_numbers = #tpu.dot_dimension_numbers<[1], [0], [0], [1], [0, 0, 1, 1], [], []>} : vector<16x256xbf16>, vector<256x128xbf16>, vector<16x128xf32> -> vector<16x128xf32>
    %c0_3 = arith.constant 0 : index
    %c0_4 = arith.constant 0 : index
    %4 = vector.load %arg3[%c0_3, %c0_4] : memref<1x128xf32, #tpu.memory_space<vmem>>, vector<1x128xf32>
    %5 = vector.broadcast %4 : vector<1x128xf32> to vector<16x128xf32>
    %6 = arith.addf %3, %5 : vector<16x128xf32>
    %cst_5 = arith.constant 0.000000e+00 : f32
    %7 = vector.broadcast %cst_5 : f32 to vector<16x128xf32>
    %8 = arith.maximumf %6, %7 : vector<16x128xf32>
    %9 = arith.truncf %8 : vector<16x128xf32> to vector<16x128xbf16>
    %c0_6 = arith.constant 0 : index
    %c0_7 = arith.constant 0 : index
    %10 = vector.load %arg4[%c0_6, %c0_7] : memref<128x128xbf16, #tpu.memory_space<vmem>>, vector<128x128xbf16>
    %cst_8 = arith.constant dense<0.000000e+00> : vector<16x128xf32>
    %11 = tpu.matmul %9, %10, %cst_8 {dimension_numbers = #tpu.dot_dimension_numbers<[1], [0], [0], [1], [0, 0, 1, 1], [], []>} : vector<16x128xbf16>, vector<128x128xbf16>, vector<16x128xf32> -> vector<16x128xf32>
    %c0_9 = arith.constant 0 : index
    %c0_10 = arith.constant 0 : index
    %12 = vector.load %arg5[%c0_9, %c0_10] : memref<1x128xf32, #tpu.memory_space<vmem>>, vector<1x128xf32>
    %13 = vector.broadcast %12 : vector<1x128xf32> to vector<16x128xf32>
    %14 = arith.addf %11, %13 : vector<16x128xf32>
    %cst_11 = arith.constant dense<0xFF800000> : vector<16xf32>
    %15 = vector.multi_reduction <maximumf>, %14, %cst_11 [1] : vector<16x128xf32> to vector<16xf32>
    %16 = vector.shape_cast %15 : vector<16xf32> to vector<16x1xf32>
    %17 = vector.broadcast %16 : vector<16x1xf32> to vector<16x128xf32>
    %18 = arith.subf %14, %17 : vector<16x128xf32>
    %19 = math.exp %18 : vector<16x128xf32>
    %cst_12 = arith.constant dense<0.000000e+00> : vector<16xf32>
    %20 = vector.multi_reduction <add>, %19, %cst_12 [1] : vector<16x128xf32> to vector<16xf32>
    %21 = vector.shape_cast %20 : vector<16xf32> to vector<16x1xf32>
    %22 = math.log %21 : vector<16x1xf32>
    %23 = vector.broadcast %22 : vector<16x1xf32> to vector<16x128xf32>
    %24 = arith.subf %18, %23 : vector<16x128xf32>
    %25 = vector.extract_strided_slice %24 {offsets = [0, 0], sizes = [16, 10], strides = [1, 1]} : vector<16x128xf32> to vector<16x10xf32>
    %c0_13 = arith.constant 0 : index
    %c0_14 = arith.constant 0 : index
    %26 = vector.load %arg6[%c0_13, %c0_14] : memref<16x10xf32, #tpu.memory_space<vmem>>, vector<16x10xf32>
    tpu.vector_store %arg6[%c0_13, %c0_14], %25 {strides = array<i32>} : memref<16x10xf32, #tpu.memory_space<vmem>>, vector<16x10xf32>,
    return
  }
  func.func @transform_0(%arg0: i32) -> (i32, i32) {
    %c0_i32 = arith.constant 0 : i32
    %c0_i32_0 = arith.constant 0 : i32
    return %arg0, %c0_i32 : i32, i32
  }
  func.func @transform_1(%arg0: i32) -> (i32, i32) {
    %c0_i32 = arith.constant 0 : i32
    %c0_i32_0 = arith.constant 0 : i32
    %c0_i32_1 = arith.constant 0 : i32
    return %c0_i32, %c0_i32_0 : i32, i32
  }
  func.func @transform_2(%arg0: i32) -> (i32, i32) {
    %c0_i32 = arith.constant 0 : i32
    %c0_i32_0 = arith.constant 0 : i32
    %c0_i32_1 = arith.constant 0 : i32
    return %c0_i32, %c0_i32_0 : i32, i32
  }
  func.func @transform_3(%arg0: i32) -> (i32, i32) {
    %c0_i32 = arith.constant 0 : i32
    %c0_i32_0 = arith.constant 0 : i32
    %c0_i32_1 = arith.constant 0 : i32
    return %c0_i32, %c0_i32_0 : i32, i32
  }
  func.func @transform_4(%arg0: i32) -> (i32, i32) {
    %c0_i32 = arith.constant 0 : i32
    %c0_i32_0 = arith.constant 0 : i32
    %c0_i32_1 = arith.constant 0 : i32
    return %c0_i32, %c0_i32_0 : i32, i32
  }
  func.func @transform_5(%arg0: i32) -> (i32, i32) {
    %c0_i32 = arith.constant 0 : i32
    %c0_i32_0 = arith.constant 0 : i32
    return %arg0, %c0_i32 : i32, i32
  }
}

</mosaic_0001>

<llo_original>
// kernel: _two_layer_net_impl.1
$region0: #{_two_layer_net_impl.1}
  #allocation0 [shape = 'u32[]', space=smem, size = 0x4, offset = 0x4, fixed_abs, tag = 'smem constant byte address 0x4 - core index']
  #allocation1 [shape = 'u32[144,128]{1,0:T(1,128)}', space=vmem, size = 0x12000, scoped, tag = 'internal scratch']
  %s0 = inlined_call_operand.vmem [shape: f32[16,256], index: 0, kind: input, shape index: {}]
  %s1 = inlined_call_operand.vmem [shape: bf16[256,128], index: 1, kind: input, shape index: {}]
  %s2 = inlined_call_operand.vmem [shape: f32[1,128], index: 2, kind: input, shape index: {}]
  %s3 = inlined_call_operand.vmem [shape: bf16[128,128], index: 3, kind: input, shape index: {}]
  %s4 = inlined_call_operand.vmem [shape: f32[1,128], index: 4, kind: input, shape index: {}]
  %s5 = inlined_call_operand.vmem [shape: f32[16,10], index: 5, kind: output, shape index: {}]
  %s6 = sld [smem:[#allocation0]]
  $region30: #{_two_layer_net_impl.1} parent=0
    _
  %s8 = ssub.s32 1, %s6
  %s9 = scalar_select 0, %s8, %s6
  // Predicated region
  $region2: #{_two_layer_net_impl.1} parent=0 // pred_check
    _
  $region3: #{_two_layer_net_impl.1} parent=0 // pred_check_branch
    %11 = sbr.rel (0) target = $region5
  $region4: #{_two_layer_net_impl.1} parent=0 // pred_region
    _
  $region5: #{_two_layer_net_impl.1} parent=0 // pred_fallthru
    _
  // Predicated region
  $region6: #{_two_layer_net_impl.1} parent=0 // pred_check
    _
  $region7: #{_two_layer_net_impl.1} parent=0 // pred_check_branch
    %13 = sbr.rel (0) target = $region9
  $region8: #{_two_layer_net_impl.1} parent=0 // pred_region
    _
  $region9: #{_two_layer_net_impl.1} parent=0 // pred_fallthru
    _
  // Predicated region
  $region10: #{_two_layer_net_impl.1} parent=0 // pred_check
    _
  $region11: #{_two_layer_net_impl.1} parent=0 // pred_check_branch
    %15 = sbr.rel (0) target = $region13
  $region12: #{_two_layer_net_impl.1} parent=0 // pred_region
    _
  $region13: #{_two_layer_net_impl.1} parent=0 // pred_fallthru
    _
  // Predicated region
  $region14: #{_two_layer_net_impl.1} parent=0 // pred_check
    _
  $region15: #{_two_layer_net_impl.1} parent=0 // pred_check_branch
    %17 = sbr.rel (0) target = $region17
  $region16: #{_two_layer_net_impl.1} parent=0 // pred_region
    _
  $region17: #{_two_layer_net_impl.1} parent=0 // pred_fallthru
    _
  // Predicated region
  $region18: #{_two_layer_net_impl.1} parent=0 // pred_check
    _
  $region19: #{_two_layer_net_impl.1} parent=0 // pred_check_branch
    %19 = sbr.rel (0) target = $region21
  $region20: #{_two_layer_net_impl.1} parent=0 // pred_region
    _
  $region21: #{_two_layer_net_impl.1} parent=0 // pred_fallthru
    _
  %v21 = vld [vmem:[%s0] sm:$0xff]
  %v22 = vld [vmem:[%s0 + $0x8] sm:$0xff]
  %v23 = vld [vmem:[%s0 + $0x10] sm:$0xff]
  %v24 = vld [vmem:[%s0 + $0x18] sm:$0xff]
  %v25 = vpack.c.bf16 %v23, %v21
  %v26 = vpack.c.bf16 %v24, %v22
  %v27 = vld [vmem:[%s1] sm:$0xf]
  %v28 = vld [vmem:[%s1 + $0x4] sm:$0xf]
  %v29 = vld [vmem:[%s1 + $0x8] sm:$0xf]
  %v30 = vld [vmem:[%s1 + $0xc] sm:$0xf]
  %v31 = vld [vmem:[%s1 + $0x10] sm:$0xf]
  %v32 = vld [vmem:[%s1 + $0x14] sm:$0xf]
  %v33 = vld [vmem:[%s1 + $0x18] sm:$0xf]
  %v34 = vld [vmem:[%s1 + $0x1c] sm:$0xf]
  %v35 = vld [vmem:[%s1 + $0x20] sm:$0xf]
  %v36 = vld [vmem:[%s1 + $0x24] sm:$0xf]
  %v37 = vld [vmem:[%s1 + $0x28] sm:$0xf]
  %v38 = vld [vmem:[%s1 + $0x2c] sm:$0xf]
  %v39 = vld [vmem:[%s1 + $0x30] sm:$0xf]
  %v40 = vld [vmem:[%s1 + $0x34] sm:$0xf]
  %v41 = vld [vmem:[%s1 + $0x38] sm:$0xf]
  %v42 = vld [vmem:[%s1 + $0x3c] sm:$0xf]
  %v43 = vld [vmem:[%s1 + $0x40] sm:$0xf]
  %v44 = vld [vmem:[%s1 + $0x44] sm:$0xf]
  %v45 = vld [vmem:[%s1 + $0x48] sm:$0xf]
  %v46 = vld [vmem:[%s1 + $0x4c] sm:$0xf]
  %v47 = vld [vmem:[%s1 + $0x50] sm:$0xf]
  %v48 = vld [vmem:[%s1 + $0x54] sm:$0xf]
  %v49 = vld [vmem:[%s1 + $0x58] sm:$0xf]
  %v50 = vld [vmem:[%s1 + $0x5c] sm:$0xf]
  %v51 = vld [vmem:[%s1 + $0x60] sm:$0xf]
  %v52 = vld [vmem:[%s1 + $0x64] sm:$0xf]
  %v53 = vld [vmem:[%s1 + $0x68] sm:$0xf]
  %v54 = vld [vmem:[%s1 + $0x6c] sm:$0xf]
  %v55 = vld [vmem:[%s1 + $0x70] sm:$0xf]
  %v56 = vld [vmem:[%s1 + $0x74] sm:$0xf]
  %v57 = vld [vmem:[%s1 + $0x78] sm:$0xf]
  %v58 = vld [vmem:[%s1 + $0x7c] sm:$0xf]
  %v59 = vld [vmem:[%s2] sm:$0x1]
  %v61 = vlaneseq
  %v62 = vshrl.u32 %v61, 7
  %v63 = vsub.s32 0, %v62
  %v64 = vrot.slane %v59, %v63
  %v98 = vunpack.c.l.b16 %v27
  %v99 = vunpack.c.l.b16 %v28
  %v100 = vunpack.c.l.b16 %v29
  %v101 = vunpack.c.l.b16 %v30
  %v102 = vunpack.c.l.b16 %v31
  %v103 = vunpack.c.l.b16 %v32
  %v104 = vunpack.c.l.b16 %v33
  %v105 = vunpack.c.l.b16 %v34
  %v106 = vunpack.c.l.b16 %v35
  %v107 = vunpack.c.l.b16 %v36
  %v108 = vunpack.c.l.b16 %v37
  %v109 = vunpack.c.l.b16 %v38
  %v110 = vunpack.c.l.b16 %v39
  %v111 = vunpack.c.l.b16 %v40
  %v112 = vunpack.c.l.b16 %v41
  %v113 = vunpack.c.l.b16 %v42
  %v114 = vunpack.c.l.b16 %v43
  %v115 = vunpack.c.l.b16 %v44
  %v116 = vunpack.c.l.b16 %v45
  %v117 = vunpack.c.l.b16 %v46
  %v118 = vunpack.c.l.b16 %v47
  %v119 = vunpack.c.l.b16 %v48
  %v120 = vunpack.c.l.b16 %v49
  %v121 = vunpack.c.l.b16 %v50
  %v122 = vunpack.c.l.b16 %v51
  %v123 = vunpack.c.l.b16 %v52
  %v124 = vunpack.c.l.b16 %v53
  %v125 = vunpack.c.l.b16 %v54
  %v126 = vunpack.c.l.b16 %v55
  %v127 = vunpack.c.l.b16 %v56
  %v128 = vunpack.c.l.b16 %v57
  %v129 = vunpack.c.l.b16 %v58
  %v130 = vpack.c.b16 %v99, %v98
  %v131 = vpack.c.b16 %v101, %v100
  %v132 = vpack.c.b16 %v103, %v102
  %v133 = vpack.c.b16 %v105, %v104
  %v134 = vpack.c.b16 %v107, %v106
  %v135 = vpack.c.b16 %v109, %v108
  %v136 = vpack.c.b16 %v111, %v110
  %v137 = vpack.c.b16 %v113, %v112
  %v138 = vpack.c.b16 %v115, %v114
  %v139 = vpack.c.b16 %v117, %v116
  %v140 = vpack.c.b16 %v119, %v118
  %v141 = vpack.c.b16 %v121, %v120
  %v142 = vpack.c.b16 %v123, %v122
  %v143 = vpack.c.b16 %v125, %v124
  %v144 = vpack.c.b16 %v127, %v126
  %v145 = vpack.c.b16 %v129, %v128
  %162 = vmatprep.subr.bf16.mxu0 0
  %163 = vmatpush1.bf16.msra.mxu0 %v137
  %164 = vmatprep.subr.bf16.mxu0 0
  %165 = vmatpush1.bf16.msra.mxu0 %v136
  %166 = vmatprep.subr.bf16.mxu0 0
  %167 = vmatpush1.bf16.msra.mxu0 %v135
  %168 = vmatprep.subr.bf16.mxu0 0
  %169 = vmatpush1.bf16.msra.mxu0 %v134
  %170 = vmatprep.subr.bf16.mxu0 0
  %171 = vmatpush1.bf16.msra.mxu0 %v133
  %172 = vmatprep.subr.bf16.mxu0 0
  %173 = vmatpush1.bf16.msra.mxu0 %v132
  %174 = vmatprep.subr.bf16.mxu0 0
  %175 = vmatpush1.bf16.msra.mxu0 %v131
  %176 = vmatprep.subr.bf16.mxu0 0
  %177 = vmatpush1.bf16.msra.mxu0 %v130
  %178 = vmatprep.subr.bf16.mxu0 0
  %179 = vmatpush2.bf16.msra.mxu0 %v145
  %180 = vmatprep.subr.bf16.mxu0 0
  %181 = vmatpush2.bf16.msra.mxu0 %v144
  %182 = vmatprep.subr.bf16.mxu0 0
  %183 = vmatpush2.bf16.msra.mxu0 %v143
  %184 = vmatprep.subr.bf16.mxu0 0
  %185 = vmatpush2.bf16.msra.mxu0 %v142
  %186 = vmatprep.subr.bf16.mxu0 0
  %187 = vmatpush2.bf16.msra.mxu0 %v141
  %188 = vmatprep.subr.bf16.mxu0 0
  %189 = vmatpush2.bf16.msra.mxu0 %v140
  %190 = vmatprep.subr.bf16.mxu0 0
  %191 = vmatpush2.bf16.msra.mxu0 %v139
  %192 = vmatprep.subr.bf16.mxu0 0
  %193 = vmatpush2.bf16.msra.mxu0 %v138
  %194 = vmatprep.mubr.bf16.mxu0 %v26
  %195 = vmatmul.mubr.bf16.gmra.mxu0 %v25
  %v196 = vpop.f32.mrf.mxu0
  %v197 = vadd.f32 %v64, %v196
  %v198 = vpop.f32.mrf.mxu0
  %v199 = vpop.f32.mrf.mxu0
  %v200 = vadd.f32 %v64, %v199
  %v201 = vpop.f32.mrf.mxu0
  %202 = vdwg.mxu0
  %v203 = vmax.f32 %v197, 0.0
  %v204 = vmax.f32 %v200, 0.0
  %v205 = vpack.c.bf16 %v204, %v203
  %v206 = vld [vmem:[%s3] sm:$0xf]
  %v207 = vld [vmem:[%s3 + $0x4] sm:$0xf]
  %v208 = vld [vmem:[%s3 + $0x8] sm:$0xf]
  %v209 = vld [vmem:[%s3 + $0xc] sm:$0xf]
  %v210 = vld [vmem:[%s3 + $0x10] sm:$0xf]
  %v211 = vld [vmem:[%s3 + $0x14] sm:$0xf]
  %v212 = vld [vmem:[%s3 + $0x18] sm:$0xf]
  %v213 = vld [vmem:[%s3 + $0x1c] sm:$0xf]
  %v214 = vld [vmem:[%s3 + $0x20] sm:$0xf]
  %v215 = vld [vmem:[%s3 + $0x24] sm:$0xf]
  %v216 = vld [vmem:[%s3 + $0x28] sm:$0xf]
  %v217 = vld [vmem:[%s3 + $0x2c] sm:$0xf]
  %v218 = vld [vmem:[%s3 + $0x30] sm:$0xf]
  %v219 = vld [vmem:[%s3 + $0x34] sm:$0xf]
  %v220 = vld [vmem:[%s3 + $0x38] sm:$0xf]
  %v221 = vld [vmem:[%s3 + $0x3c] sm:$0xf]
  %v222 = vld [vmem:[%s4] sm:$0x1]
  %v224 = vlaneseq
  %v225 = vshrl.u32 %v224, 7
  %v226 = vsub.s32 0, %v225
  %v227 = vrot.slane %v222, %v226
  %v245 = vunpack.c.l.b16 %v206
  %v246 = vunpack.c.l.b16 %v207
  %v247 = vunpack.c.l.b16 %v208
  %v248 = vunpack.c.l.b16 %v209
  %v249 = vunpack.c.l.b16 %v210
  %v250 = vunpack.c.l.b16 %v211
  %v251 = vunpack.c.l.b16 %v212
  %v252 = vunpack.c.l.b16 %v213
  %v253 = vunpack.c.l.b16 %v214
  %v254 = vunpack.c.l.b16 %v215
  %v255 = vunpack.c.l.b16 %v216
  %v256 = vunpack.c.l.b16 %v217
  %v257 = vunpack.c.l.b16 %v218
  %v258 = vunpack.c.l.b16 %v219
  %v259 = vunpack.c.l.b16 %v220
  %v260 = vunpack.c.l.b16 %v221
  %v261 = vpack.c.b16 %v246, %v245
  %v262 = vpack.c.b16 %v248, %v247
  %v263 = vpack.c.b16 %v250, %v249
  %v264 = vpack.c.b16 %v252, %v251
  %v265 = vpack.c.b16 %v254, %v253
  %v266 = vpack.c.b16 %v256, %v255
  %v267 = vpack.c.b16 %v258, %v257
  %v268 = vpack.c.b16 %v260, %v259
  %277 = vmatprep.subr.bf16.mxu0 0
  %278 = vmatpush1.bf16.msra.mxu0 %v268
  %279 = vmatprep.subr.bf16.mxu0 0
  %280 = vmatpush1.bf16.msra.mxu0 %v267
  %281 = vmatprep.subr.bf16.mxu0 0
  %282 = vmatpush1.bf16.msra.mxu0 %v266
  %283 = vmatprep.subr.bf16.mxu0 0
  %284 = vmatpush1.bf16.msra.mxu0 %v265
  %285 = vmatprep.subr.bf16.mxu0 0
  %286 = vmatpush1.bf16.msra.mxu0 %v264
  %287 = vmatprep.subr.bf16.mxu0 0
  %288 = vmatpush1.bf16.msra.mxu0 %v263
  %289 = vmatprep.subr.bf16.mxu0 0
  %290 = vmatpush1.bf16.msra.mxu0 %v262
  %291 = vmatprep.subr.bf16.mxu0 0
  %292 = vmatpush1.bf16.msra.mxu0 %v261
  %293 = vmatprep.subr.bf16.mxu0 0
  %294 = vmatpush2.bf16.msra.mxu0 0
  %295 = vmatprep.subr.bf16.mxu0 0
  %296 = vmatpush2.bf16.msra.mxu0 0
  %297 = vmatprep.subr.bf16.mxu0 0
  %298 = vmatpush2.bf16.msra.mxu0 0
  %299 = vmatprep.subr.bf16.mxu0 0
  %300 = vmatpush2.bf16.msra.mxu0 0
  %301 = vmatprep.subr.bf16.mxu0 0
  %302 = vmatpush2.bf16.msra.mxu0 0
  %303 = vmatprep.subr.bf16.mxu0 0
  %304 = vmatpush2.bf16.msra.mxu0 0
  %305 = vmatprep.subr.bf16.mxu0 0
  %306 = vmatpush2.bf16.msra.mxu0 0
  %307 = vmatprep.subr.bf16.mxu0 0
  %308 = vmatpush2.bf16.msra.mxu0 0
  %309 = vmatprep.mubr.bf16.mxu0 0
  %310 = vmatmul.mubr.bf16.gmra.mxu0 %v205
  %v311 = vpop.f32.mrf.mxu0
  %v312 = vadd.f32 %v227, %v311
  %v313 = vpop.f32.mrf.mxu0
  %v314 = vpop.f32.mrf.mxu0
  %v315 = vadd.f32 %v227, %v314
  %v316 = vpop.f32.mrf.mxu0
  %317 = vdwg.mxu0
  %318 = vmax.xlane.f32.xlu0 %v312
  %v319 = vpop.xlane.xlu0 %318
  %320 = vmax.xlane.f32.xlu0 %v315
  %v321 = vpop.xlane.xlu0 %320
  %v322 = vsub.f32 %v312, %v319
  %v323 = vsub.f32 %v315, %v321
  %v324 = vmul.f32 %v322, 1.442695
  %v325 = vpow.pop %v324
  %v326 = vmul.f32 %v323, 1.442695
  %v327 = vpow.pop %v326
  %328 = vadd.xlane.f32.xlu0 %v325
  %v329 = vpop.xlane.xlu0 %328
  %330 = vadd.xlane.f32.xlu0 %v327
  %v331 = vpop.xlane.xlu0 %330
  %v332 = vlog2.pop %v329
  %v333 = vmul.f32 %v332, 0.6931472
  %v334 = vlog2.pop %v331
  %v335 = vmul.f32 %v334, 0.6931472
  %v336 = vsub.f32 %v322, %v333
  %v337 = vsub.f32 %v323, %v335
  %vm338 = vcmask 80896
  %339 = vst.msk [vmem:[%s5] sm:$0xff] %vm338, %v336
  %340 = vst.msk [vmem:[%s5 + $0x8] sm:$0xff] %vm338, %v337
  // Predicated region
  $region22: #{_two_layer_net_impl.1} parent=0 // pred_check
    _
  $region23: #{_two_layer_net_impl.1} parent=0 // pred_check_branch
    %342 = sbr.rel (0) target = $region25
  $region24: #{_two_layer_net_impl.1} parent=0 // pred_region
    _
  $region25: #{_two_layer_net_impl.1} parent=0 // pred_fallthru
    _
  // Predicated region
  $region26: #{_two_layer_net_impl.1} parent=0 // pred_check
    _
  $region27: #{_two_layer_net_impl.1} parent=0 // pred_check_branch
    %344 = sbr.rel (0) target = $region29
  $region28: #{_two_layer_net_impl.1} parent=0 // pred_region
    _
  $region29: #{_two_layer_net_impl.1} parent=0 // pred_fallthru
    _

</llo_original>
